<compile_context>
chip_gen: v7x
topology: tpu7x:2x2x1
jax: 0.10.0
libtpu: 0.0.40
codegen_flags: <defaults>
</compile_context>

<pallas_src>
import numpy as np
import jax
import jax.numpy as jnp
from jax import lax
from jax.experimental import pallas as pl
from jax.experimental.pallas import tpu as pltpu


def _season_kernel(wc_ref, bc_ref, x_ref, o_ref):
    """One fused dot per block: out = Wc @ x + bc.

    wc_ref: (out_dim, in_dim)   folded weight  poly_space^T @ W
    bc_ref: (out_dim, 1)        folded bias    poly_space^T @ b   (column vector)
    x_ref : (in_dim, L)         L time columns
    o_ref : (out_dim, L)
    """
    out = jnp.dot(wc_ref[...], x_ref[...], preferred_element_type=jnp.float32)
    o_ref[...] = (out + bc_ref[...]).astype(o_ref.dtype)   # lane-broadcast bias


def _pick_h_tile(h):
    """Largest lane-dense tile of the time axis (<= 2048, multiple of 128)."""
    if h <= 2048:
        return h
    for cand in (2048, 1024, 512, 256, 128):
        if h % cand == 0:
            return cand
    return h


def season_block(x, weight, bias, poly_space):
    """Pallas SeasonBlock forward.

    x          : (B, in_dim, H) float32
    weight     : (season_poly, in_dim)  Conv1d kernel_size=1 weight (kernel dim squeezed)
    bias       : (season_poly,)
    poly_space : (season_poly, out_dim)
    returns    : (B, out_dim, H) float32
    """
    b, c, h = x.shape
    sp, in_dim = weight.shape
    sp2, out_dim = poly_space.shape
    assert in_dim == c and sp2 == sp

    # Fold the basis matmul into the conv weight (mathematically identical):
    #   P^T @ (W @ x + bias) == (P^T W) @ x + P^T bias
    pt = jnp.transpose(poly_space).astype(jnp.float32)                      # (out_dim, sp)
    wc = jnp.dot(pt, weight.astype(jnp.float32),
                 precision=lax.Precision.HIGHEST)                           # (out_dim, in_dim)
    bc = jnp.dot(pt, bias.astype(jnp.float32).reshape(sp, 1),
                 precision=lax.Precision.HIGHEST)                           # (out_dim, 1)

    if h % 128 == 0:
        # Fast path: H is already lane-dense -> no packing transposes.
        # Grid over (batch, H-tiles); output written directly as (B, out_dim, H).
        tile_h = _pick_h_tile(h)
        grid = (b, h // tile_h)
        return pl.pallas_call(
            _season_kernel,
            out_shape=jax.ShapeDtypeStruct((b, out_dim, h), jnp.float32),
            grid=grid,
            in_specs=[
                pl.BlockSpec((out_dim, in_dim), lambda bi, j: (0, 0)),      # Wc (grid-invariant)
                pl.BlockSpec((out_dim, 1), lambda bi, j: (0, 0)),           # bc (grid-invariant)
                pl.BlockSpec((pl.Squeezed(), in_dim, tile_h),
                             lambda bi, j: (bi, 0, j)),                     # x[b, :, tile]
            ],
            out_specs=pl.BlockSpec((pl.Squeezed(), out_dim, tile_h),
                                   lambda bi, j: (bi, 0, j)),
            compiler_params=pltpu.CompilerParams(
                dimension_semantics=("parallel", "parallel")),
        )(wc, bc, x.astype(jnp.float32))

    # Ragged-H fallback: pack columns as (C, B*H) and zero-pad the lane axis to
    # a multiple of the lane block so stores stay unmasked and pipelining stays on.
    total = b * h
    lane = min(1024, ((total + 127) // 128) * 128)
    total_p = ((total + lane - 1) // lane) * lane
    x2 = jnp.transpose(x, (1, 0, 2)).reshape(c, total).astype(jnp.float32)  # col j = b*H + t
    if total_p != total:
        x2 = jnp.pad(x2, ((0, 0), (0, total_p - total)))
    out2 = pl.pallas_call(
        _season_kernel,
        out_shape=jax.ShapeDtypeStruct((out_dim, total_p), jnp.float32),
        grid=(total_p // lane,),
        in_specs=[
            pl.BlockSpec((out_dim, in_dim), lambda j: (0, 0)),
            pl.BlockSpec((out_dim, 1), lambda j: (0, 0)),
            pl.BlockSpec((c, lane), lambda j: (0, j)),
        ],
        out_specs=pl.BlockSpec((out_dim, lane), lambda j: (0, j)),
        compiler_params=pltpu.CompilerParams(dimension_semantics=("parallel",)),
    )(wc, bc, x2)
    out2 = out2[:, :total]
    return jnp.transpose(out2.reshape(out_dim, b, h), (1, 0, 2))            # (B, out_dim, H)


def make_poly_space(out_dim, factor=1):
    """Numpy port of the PyTorch __init__ poly_space construction."""
    season_poly = factor * min(32, out_dim // 2)
    t = np.arange(out_dim, dtype=np.float64) / out_dim
    p1 = season_poly // 2
    p2 = season_poly // 2 if season_poly % 2 == 0 else season_poly // 2 + 1
    s1 = np.stack([np.cos(2 * np.pi * p * t) for p in range(1, p1 + 1)], axis=0)
    s2 = np.stack([np.sin(2 * np.pi * p * t) for p in range(1, p2 + 1)], axis=0)
    return np.concatenate([s1, s2], axis=0).astype(np.float32)              # (season_poly, out_dim)


def reference_season_block(x, weight, bias, poly_space):
    """Pure-JAX port of the PyTorch forward (verification only)."""
    xc = jnp.einsum("pc,bch->bph", weight, x) + bias[None, :, None]         # Conv1d(k=1)
    return jnp.einsum("bph,po->boh", xc, poly_space)                        # (B, out_dim, H)


if __name__ == "__main__":
    key = jax.random.PRNGKey(0)
    B, IN_DIM, H = 4, 4, 128            # (batch, in_dim channels, sequence length)
    OUT_DIM, FACTOR = 32, 1
    season_poly = FACTOR * min(32, OUT_DIM // 2)      # = 16

    kx, kw, kb = jax.random.split(key, 3)
    x = jax.random.normal(kx, (B, IN_DIM, H), dtype=jnp.float32)
    weight = 0.1 * jax.random.normal(kw, (season_poly, IN_DIM), dtype=jnp.float32)
    bias = 0.1 * jax.random.normal(kb, (season_poly,), dtype=jnp.float32)
    poly = jnp.asarray(make_poly_space(OUT_DIM, FACTOR))                    # (16, 32)

    # Fast path (H % 128 == 0): no wrapper transposes, grid over batch.
    y = season_block(x, weight, bias, poly)
    y = jax.block_until_ready(y)
    assert y.shape == (B, OUT_DIM, H)
    y_ref = reference_season_block(x, weight, bias, poly)
    np.testing.assert_allclose(np.asarray(y), np.asarray(y_ref), rtol=2e-2, atol=2e-2)

    # Ragged fallback (H not a multiple of 128): packed + zero-padded lane axis.
    H2 = 96
    x_r = jax.random.normal(kx, (2, IN_DIM, H2), dtype=jnp.float32)
    y_r = jax.block_until_ready(season_block(x_r, weight, bias, poly))
    assert y_r.shape == (2, OUT_DIM, H2)
    y_r_ref = reference_season_block(x_r, weight, bias, poly)
    np.testing.assert_allclose(np.asarray(y_r), np.asarray(y_r_ref), rtol=2e-2, atol=2e-2)

    print("KERNEL_OK")
</pallas_src>

<mosaic_0001>
module attributes {stable_mosaic.version = 11 : i64} {
  func.func @_season_kernel(%arg0: i32, %arg1: i32, %arg2: memref<32x4xf32, #tpu.memory_space<vmem>>, %arg3: memref<32x1xf32, #tpu.memory_space<vmem>>, %arg4: memref<1x4x128xf32, #tpu.memory_space<vmem>>, %arg5: memref<1x32x128xf32, #tpu.memory_space<vmem>>) attributes {dimension_semantics = [#tpu.dimension_semantics<parallel>, #tpu.dimension_semantics<parallel>], iteration_bounds = array<i64: 4, 1>, scalar_prefetch = 0 : i64, scratch_operands = 0 : i64, tpu.core_type = #tpu.core_type<tc>, window_params = [{pipeline_mode = #tpu.pipeline_mode<synchronous>, transform_indices = @transform_0, window_bounds = array<i64: 32, 4>}, {pipeline_mode = #tpu.pipeline_mode<synchronous>, transform_indices = @transform_1, window_bounds = array<i64: 32, 1>}, {transform_indices = @transform_2, window_bounds = array<i64: 1, 4, 128>}, {transform_indices = @transform_3, window_bounds = array<i64: 1, 32, 128>}]} {
    %c0 = arith.constant 0 : index
    %c0_0 = arith.constant 0 : index
    %0 = vector.load %arg2[%c0, %c0_0] : memref<32x4xf32, #tpu.memory_space<vmem>>, vector<32x4xf32>
    %c0_1 = arith.constant 0 : index
    %c0_2 = arith.constant 0 : index
    %c0_3 = arith.constant 0 : index
    %1 = vector.load %arg4[%c0_1, %c0_2, %c0_3] : memref<1x4x128xf32, #tpu.memory_space<vmem>>, vector<1x4x128xf32>
    %2 = vector.shape_cast %1 : vector<1x4x128xf32> to vector<4x128xf32>
    %cst = arith.constant dense<0.000000e+00> : vector<32x128xf32>
    %3 = tpu.matmul %0, %2, %cst {dimension_numbers = #tpu.dot_dimension_numbers<[1], [0], [0], [1], [0, 0, 1, 1], [], []>} : vector<32x4xf32>, vector<4x128xf32>, vector<32x128xf32> -> vector<32x128xf32>
    %c0_4 = arith.constant 0 : index
    %c0_5 = arith.constant 0 : index
    %4 = vector.load %arg3[%c0_4, %c0_5] : memref<32x1xf32, #tpu.memory_space<vmem>>, vector<32x1xf32>
    %5 = vector.broadcast %4 : vector<32x1xf32> to vector<32x128xf32>
    %6 = arith.addf %3, %5 : vector<32x128xf32>
    %c0_6 = arith.constant 0 : index
    %c0_7 = arith.constant 0 : index
    %c0_8 = arith.constant 0 : index
    %7 = vector.load %arg5[%c0_6, %c0_7, %c0_8] : memref<1x32x128xf32, #tpu.memory_space<vmem>>, vector<1x32x128xf32>
    %8 = vector.shape_cast %7 : vector<1x32x128xf32> to vector<32x128xf32>
    %9 = vector.shape_cast %6 : vector<32x128xf32> to vector<1x32x128xf32>
    tpu.vector_store %arg5[%c0_6, %c0_7, %c0_8], %9 {strides = array<i32>} : memref<1x32x128xf32, #tpu.memory_space<vmem>>, vector<1x32x128xf32>,
    return
  }
  func.func @transform_0(%arg0: i32, %arg1: i32) -> (i32, i32) {
    %c0_i32 = arith.constant 0 : i32
    %c0_i32_0 = arith.constant 0 : i32
    %c0_i32_1 = arith.constant 0 : i32
    return %c0_i32, %c0_i32_0 : i32, i32
  }
  func.func @transform_1(%arg0: i32, %arg1: i32) -> (i32, i32) {
    %c0_i32 = arith.constant 0 : i32
    %c0_i32_0 = arith.constant 0 : i32
    %c0_i32_1 = arith.constant 0 : i32
    return %c0_i32, %c0_i32_0 : i32, i32
  }
  func.func @transform_2(%arg0: i32, %arg1: i32) -> (i32, i32, i32) {
    %c0_i32 = arith.constant 0 : i32
    %c0_i32_0 = arith.constant 0 : i32
    return %arg0, %c0_i32, %arg1 : i32, i32, i32
  }
  func.func @transform_3(%arg0: i32, %arg1: i32) -> (i32, i32, i32) {
    %c0_i32 = arith.constant 0 : i32
    %c0_i32_0 = arith.constant 0 : i32
    return %arg0, %c0_i32, %arg1 : i32, i32, i32
  }
}

</mosaic_0001>

<llo_original>
// kernel: tpu_custom_call.1
$region0: #{tpu_custom_call.1}
  #allocation0 [shape = 'u32[]', space=smem, size = 0x4, offset = 0x4, fixed_abs, tag = 'smem constant byte address 0x4 - core index']
  #allocation1 [shape = 'u32[144,128]{1,0:T(1,128)}', space=vmem, size = 0x12000, scoped, tag = 'internal scratch']
  %s0 = inlined_call_operand.vmem [shape: f32[32,4], index: 0, kind: input, shape index: {}]
  %s1 = inlined_call_operand.vmem [shape: f32[32,1], index: 1, kind: input, shape index: {}]
  %s2 = inlined_call_operand.vmem [shape: f32[4,4,128], index: 2, kind: input, shape index: {}]
  %s3 = inlined_call_operand.hbm [shape: f32[4,32,128], index: 3, kind: output, shape index: {}]
  %s4 = sld [smem:[#allocation0]]
  $region45: #{tpu_custom_call.1} parent=0
    _
  %s6 = ssub.s32 1, %s4
  %s7 = scalar_select 0, %s6, %s4
  $region1: #{tpu_custom_call.1} parent=0
    #allocation2 [shape = 'u8[32768]{0}', space=vmem, size = 0x8000, scoped, tag = 'output window, operand 0']
    #allocation3 [shape = 's32[2]{0}', space=sflag, size = 0x8, scoped, tag = 'scoped memory for tpu_custom_call.1']
    %8 = vsyncpa [#allocation3], 0
    %s9 = scalar_lea.sflag [#allocation3], 1
    %10 = vsyncpa %s9, 0
    loop: start=0, step=1, limit=6
    $region2: #{tpu_custom_call.1} parent=1 // loop_pre_header
      _
    $region3: #{tpu_custom_call.1} parent=1 // loop_header
      %s12 = sphi 0, %s16
      %p13 = scmp.ge.s32.totalorder %s12, 6
      %s19 = sphi 0, %s31
      %s20 = sphi 0, %s27
      %s21 = sphi 0, %s19
      %s22 = sphi 0, %s20
      %s23 = sphi 0, %s21
      %s24 = sphi 0, %s22
      %s32 = sphi 0, %s32
      %s34 = sphi 0, %s32
      %s35 = sphi 0, %s34
      %s49 = sphi 0, %s35
      %s53 = sphi 0, %s53
      %s55 = sphi 0, %s53
      %s56 = sphi 0, %s55
      %s70 = sphi 0, %s56
      %s78 = sphi 0, %s80
      %s81 = sphi 0, %s78
      %s82 = sphi 0, %s81
      %s98 = sphi 0, %s82
      %s106 = sphi 0, %s108
      %s109 = sphi 0, %s106
      %s110 = sphi 0, %s109
      %s126 = sphi 0, %s110
    $region4: #{tpu_custom_call.1} parent=1 // loop_header_branch
      %15 = sbr.rel (%p13) target = $region8
    $region5: #{tpu_custom_call.1} parent=1 // loop_body
      %s17 = ssub.s32 %s12, 1
      %s18 = ssub.s32 %s12, 2
      %s25 = sadd.s32 1, %s20
      %p26 = scmp.ge.s32.totalorder %s25, 1
      %s27 = scalar_select %p26, 0, %s25
      %s28 = sadd.s32 1, %s19
      %s29 = scalar_select %p26, %s28, %s19
      %p30 = scmp.ge.s32.totalorder %s29, 4
      %s31 = scalar_select %p30, 0, %s29
      %s33 = sadd.s32 %s32, 1
      %p36 = scmp.eq.s32.totalorder %s12, 3
      %p37 = scmp.ne.s32.totalorder %s32, %s34
      %p38 = scmp.eq.s32.totalorder %s12, 0
      %p39 = por %p37, %p38
      %p40 = scmp.ne.s32.totalorder %s32, %s34
      %p41 = scmp.eq.s32.totalorder %s17, 3
      %p42 = por %p40, %p41
      %p43 = scmp.ne.s32.totalorder %s34, %s35
      %p44 = scmp.eq.s32.totalorder %s17, 0
      %p45 = por %p43, %p44
      %p46 = scmp.ne.s32.totalorder %s34, %s35
      %p47 = scmp.eq.s32.totalorder %s18, 3
      %p48 = por %p46, %p47
      %p50 = scmp.ne.s32.totalorder %s35, %s49
      %p51 = scmp.eq.s32.totalorder %s18, 0
      %p52 = por %p50, %p51
      %s54 = sadd.s32 %s53, 1
      %p57 = scmp.eq.s32.totalorder %s12, 3
      %p58 = scmp.ne.s32.totalorder %s53, %s55
      %p59 = scmp.eq.s32.totalorder %s12, 0
      %p60 = por %p58, %p59
      %p61 = scmp.ne.s32.totalorder %s53, %s55
      %p62 = scmp.eq.s32.totalorder %s17, 3
      %p63 = por %p61, %p62
      %p64 = scmp.ne.s32.totalorder %s55, %s56
      %p65 = scmp.eq.s32.totalorder %s17, 0
      %p66 = por %p64, %p65
      %p67 = scmp.ne.s32.totalorder %s55, %s56
      %p68 = scmp.eq.s32.totalorder %s18, 3
      %p69 = por %p67, %p68
      %p71 = scmp.ne.s32.totalorder %s56, %s70
      %p72 = scmp.eq.s32.totalorder %s18, 0
      %p73 = por %p71, %p72
      %s74 = ssub.s32 %s19, %s31
      %s75 = ssub.s32 %s20, %s27
      %s76 = sor.u32 %s74, %s75
      %p77 = scmp.eq.s32.totalorder %s76, 0
      %s79 = sadd.s32 %s78, 1
      %s80 = scalar_select %p77, %s78, %s79
      %p83 = pneg %p77
      %p84 = scmp.eq.s32.totalorder %s12, 3
      %p85 = por %p83, %p84
      %p86 = scmp.ne.s32.totalorder %s78, %s81
      %p87 = scmp.eq.s32.totalorder %s12, 0
      %p88 = por %p86, %p87
      %p89 = scmp.ne.s32.totalorder %s78, %s81
      %p90 = scmp.eq.s32.totalorder %s17, 3
      %p91 = por %p89, %p90
      %p92 = scmp.ne.s32.totalorder %s81, %s82
      %p93 = scmp.eq.s32.totalorder %s17, 0
      %p94 = por %p92, %p93
      %p95 = scmp.ne.s32.totalorder %s81, %s82
      %p96 = scmp.eq.s32.totalorder %s18, 3
      %p97 = por %p95, %p96
      %p99 = scmp.ne.s32.totalorder %s82, %s98
      %p100 = scmp.eq.s32.totalorder %s18, 0
      %p101 = por %p99, %p100
      %s102 = ssub.s32 %s19, %s31
      %s103 = ssub.s32 %s20, %s27
      %s104 = sor.u32 %s102, %s103
      %p105 = scmp.eq.s32.totalorder %s104, 0
      %s107 = sadd.s32 %s106, 1
      %s108 = scalar_select %p105, %s106, %s107
      %p111 = pneg %p105
      %p112 = scmp.eq.s32.totalorder %s12, 3
      %p113 = por %p111, %p112
      %p114 = scmp.ne.s32.totalorder %s106, %s109
      %p115 = scmp.eq.s32.totalorder %s12, 0
      %p116 = por %p114, %p115
      %p117 = scmp.ne.s32.totalorder %s106, %s109
      %p118 = scmp.eq.s32.totalorder %s17, 3
      %p119 = por %p117, %p118
      %p120 = scmp.ne.s32.totalorder %s109, %s110
      %p121 = scmp.eq.s32.totalorder %s17, 0
      %p122 = por %p120, %p121
      %p123 = scmp.ne.s32.totalorder %s109, %s110
      %p124 = scmp.eq.s32.totalorder %s18, 3
      %p125 = por %p123, %p124
      %p127 = scmp.ne.s32.totalorder %s110, %s126
      %p128 = scmp.eq.s32.totalorder %s18, 0
      %p129 = por %p127, %p128
      %p130 = scmp.le.s32.totalorder 1, %s12
      %p131 = scmp.lt.s32.totalorder %s12, 5
      %p132 = pnand %p130, %p131
      %p133 = pneg %p132
      // Predicated region
      $region9: #{tpu_custom_call.1} parent=5 // pred_check
        _
      $region10: #{tpu_custom_call.1} parent=5 // pred_check_branch
        %135 = sbr.rel (%p132) target = $region12
      $region11: #{tpu_custom_call.1} parent=5 // pred_region
        %s136 = ssub.s32 %s12, 1
        // Predicated region
        $region13: #{tpu_custom_call.1} parent=11 // pred_check
          %p137 = pneg %p45
        $region14: #{tpu_custom_call.1} parent=11 // pred_check_branch
          %139 = sbr.rel (%p137) target = $region16
        $region15: #{tpu_custom_call.1} parent=11 // pred_region
          _
        $region16: #{tpu_custom_call.1} parent=11 // pred_fallthru
          _
        // Predicated region
        $region17: #{tpu_custom_call.1} parent=11 // pred_check
          %p140 = pneg %p66
        $region18: #{tpu_custom_call.1} parent=11 // pred_check_branch
          %142 = sbr.rel (%p140) target = $region20
        $region19: #{tpu_custom_call.1} parent=11 // pred_region
          _
        $region20: #{tpu_custom_call.1} parent=11 // pred_fallthru
          _
      $region12: #{tpu_custom_call.1} parent=5 // pred_fallthru
        _
      %p143 = scmp.lt.s32.totalorder %s12, 4
      // Predicated region
      $region21: #{tpu_custom_call.1} parent=5 // pred_check
        %p144 = pneg %p143
      $region22: #{tpu_custom_call.1} parent=5 // pred_check_branch
        %146 = sbr.rel (%p144) target = $region24
      $region23: #{tpu_custom_call.1} parent=5 // pred_region
        // Predicated region
        $region25: #{tpu_custom_call.1} parent=23 // pred_check
          %p147 = pneg %p88
        $region26: #{tpu_custom_call.1} parent=23 // pred_check_branch
          %149 = sbr.rel (%p147) target = $region28
        $region27: #{tpu_custom_call.1} parent=23 // pred_region
          %p150 = scmp.lt.s32.totalorder %s19, 3
          %s151 = scalar_select %p150, %s19, 3
          %p152 = scmp.lt.s32.totalorder %s20, 0
          %s153 = scalar_select %p152, %s20, 0
          %s154 = sadd.s32 %s153, %s151
          %s155 = smul.addr %s154, 4
          %s156 = scalar_lea.vmem %s2, %s155
        $region28: #{tpu_custom_call.1} parent=23 // pred_fallthru
          _
      $region24: #{tpu_custom_call.1} parent=5 // pred_fallthru
        _
      %p157 = scmp.le.s32.totalorder 1, %s12
      %p158 = scmp.lt.s32.totalorder %s12, 5
      %p159 = pnand %p157, %p158
      %p160 = pneg %p159
      // Predicated region
      $region29: #{tpu_custom_call.1} parent=5 // pred_check
        _
      $region30: #{tpu_custom_call.1} parent=5 // pred_check_branch
        %162 = sbr.rel (%p159) target = $region32
      $region31: #{tpu_custom_call.1} parent=5 // pred_region
        %s163 = ssub.s32 %s12, 1
        %p164 = pneg %p45
        %p165 = pneg %p42
        %p166 = pneg %p66
        %p167 = pneg %p63
        %p168 = scmp.lt.s32.totalorder %s21, 3
        %s169 = scalar_select %p168, %s21, 3
        %p170 = scmp.lt.s32.totalorder %s22, 0
        %s171 = scalar_select %p170, %s22, 0
        %s172 = sadd.s32 %s171, %s169
        %s173 = smul.addr %s172, 4
        %s174 = scalar_lea.vmem %s2, %s173
        %p175 = pneg %p94
        %p176 = pneg %p91
        %p177 = pneg %p122
        %p178 = pneg %p119
        %s179 = sand.u32 %s109, 1
        %s180 = scalar_lea.sflag [#allocation3], %s179
        %s181 = sand.u32 %s109, 1
        %s182 = smul.addr %s181, 32
        %s183 = scalar_lea.vmem [#allocation2], %s182
        %p184 = scmp.lt.s32.totalorder %s21, 3
        %s185 = scalar_select %p184, %s21, 3
        %p186 = scmp.lt.s32.totalorder %s22, 0
        %s187 = scalar_select %p186, %s22, 0
        %s188 = sadd.s32 %s187, %s185
        %s189 = smul.addr %s188, 4
        %s190 = scalar_lea.vmem %s2, %s189
        %v191 = vld [vmem:[%s0] sm:$0xff]
        %v192 = vld [vmem:[%s0 + $0x8] sm:$0xff]
        %v193 = vld [vmem:[%s0 + $0x10] sm:$0xff]
        %v194 = vld [vmem:[%s0 + $0x18] sm:$0xff]
        %v195 = vld [vmem:[%s190] sm:$0xf]
        %v196 = vld [vmem:[%s1] sm:$0xff]
        %v197 = vld [vmem:[%s1 + $0x8] sm:$0xff]
        %v198 = vld [vmem:[%s1 + $0x10] sm:$0xff]
        %v199 = vld [vmem:[%s1 + $0x18] sm:$0xff]
        %201 = vset.pattern.permute.xlu0 0
        %202 = vperm.xlu0 %201, %v196
        %v203 = vpop.permute.xlu0 %202
        %206 = vset.pattern.permute.xlu0 0
        %207 = vperm.xlu0 %206, %v197
        %v208 = vpop.permute.xlu0 %207
        %211 = vset.pattern.permute.xlu0 0
        %212 = vperm.xlu0 %211, %v198
        %v213 = vpop.permute.xlu0 %212
        %216 = vset.pattern.permute.xlu0 0
        %217 = vperm.xlu0 %216, %v199
        %v218 = vpop.permute.xlu0 %217
        %vm220 = vcmask 31744
        %v222 = vsel %vm220, %v191, 0
        %v225 = vsel %vm220, %v192, 0
        %v228 = vsel %vm220, %v193, 0
        %v231 = vsel %vm220, %v194, 0
        %vm233 = vcmask 1043456
        %v235 = vsel %vm233, %v195, 0
        %237 = vmatprep.subr.mxu0 0.0
        %238 = vmatpush1.msra.mxu0 %v235
        %239 = vmatprep.subr.mxu0 0.0
        %240 = vmatpush1.msra.mxu0 0.0
        %241 = vmatprep.subr.mxu0 0.0
        %242 = vmatpush1.msra.mxu0 0.0
        %243 = vmatprep.subr.mxu0 0.0
        %244 = vmatpush1.msra.mxu0 0.0
        %245 = vmatprep.subr.mxu0 0.0
        %246 = vmatpush1.msra.mxu0 0.0
        %247 = vmatprep.subr.mxu0 0.0
        %248 = vmatpush1.msra.mxu0 0.0
        %249 = vmatprep.subr.mxu0 0.0
        %250 = vmatpush1.msra.mxu0 0.0
        %251 = vmatprep.subr.mxu0 0.0
        %252 = vmatpush1.msra.mxu0 0.0
        %253 = vmatprep.subr.mxu0 0.0
        %254 = vmatpush1.msra.mxu0 0.0
        %255 = vmatprep.subr.mxu0 0.0
        %256 = vmatpush1.msra.mxu0 0.0
        %257 = vmatprep.subr.mxu0 0.0
        %258 = vmatpush1.msra.mxu0 0.0
        %259 = vmatprep.subr.mxu0 0.0
        %260 = vmatpush1.msra.mxu0 0.0
        %261 = vmatprep.subr.mxu0 0.0
        %262 = vmatpush1.msra.mxu0 0.0
        %263 = vmatprep.subr.mxu0 0.0
        %264 = vmatpush1.msra.mxu0 0.0
        %265 = vmatprep.subr.mxu0 0.0
        %266 = vmatpush1.msra.mxu0 0.0
        %267 = vmatprep.subr.mxu0 0.0
        %268 = vmatpush1.msra.mxu0 0.0
        %269 = vmatprep.subr.mxu0 0.0
        %270 = vmatpush1.msra.mxu0 0.0
        %271 = vmatprep.subr.mxu0 0.0
        %272 = vmatpush1.msra.mxu0 0.0
        %273 = vmatprep.subr.mxu0 0.0
        %274 = vmatpush1.msra.mxu0 0.0
        %275 = vmatprep.subr.mxu0 0.0
        %276 = vmatpush1.msra.mxu0 0.0
        %277 = vmatprep.subr.mxu0 0.0
        %278 = vmatpush1.msra.mxu0 0.0
        %279 = vmatprep.subr.mxu0 0.0
        %280 = vmatpush1.msra.mxu0 0.0
        %281 = vmatprep.subr.mxu0 0.0
        %282 = vmatpush1.msra.mxu0 0.0
        %283 = vmatprep.subr.mxu0 0.0
        %284 = vmatpush1.msra.mxu0 0.0
        %285 = vmatprep.subr.mxu0 0.0
        %286 = vmatpush1.msra.mxu0 0.0
        %287 = vmatprep.subr.mxu0 0.0
        %288 = vmatpush1.msra.mxu0 0.0
        %289 = vmatprep.subr.mxu0 0.0
        %290 = vmatpush1.msra.mxu0 0.0
        %291 = vmatprep.subr.mxu0 0.0
        %292 = vmatpush1.msra.mxu0 0.0
        %293 = vmatprep.subr.mxu0 0.0
        %294 = vmatpush1.msra.mxu0 0.0
        %295 = vmatprep.subr.mxu0 0.0
        %296 = vmatpush1.msra.mxu0 0.0
        %297 = vmatprep.subr.mxu0 0.0
        %298 = vmatpush1.msra.mxu0 0.0
        %299 = vmatprep.subr.mxu0 0.0
        %300 = vmatpush1.msra.mxu0 0.0
        %301 = vmatprep.mubr.f32.mxu0 0.0
        %302 = vmatmul.mubr.f32.gmra.mrb[0].mxu0 %v222
        %v303 = vpop.f32.mrb[0].mxu0
        %v304 = vadd.f32 %v203, %v303
        %v305 = vpop.f32.mrb[0].mxu0
        %306 = vmatprep.mubr.f32.mxu0 0.0
        %307 = vmatmul.mubr.f32.gmra.mrb[0].mxu0 %v225
        %v308 = vpop.f32.mrb[0].mxu0
        %v309 = vadd.f32 %v208, %v308
        %v310 = vpop.f32.mrb[0].mxu0
        %311 = vmatprep.mubr.f32.mxu0 0.0
        %312 = vmatmul.mubr.f32.gmra.mrb[0].mxu0 %v228
        %v313 = vpop.f32.mrb[0].mxu0
        %v314 = vadd.f32 %v213, %v313
        %v315 = vpop.f32.mrb[0].mxu0
        %316 = vmatprep.mubr.f32.mxu0 0.0
        %317 = vmatmul.mubr.f32.gmra.mrb[0].mxu0 %v231
        %v318 = vpop.f32.mrb[0].mxu0
        %v319 = vadd.f32 %v218, %v318
        %v320 = vpop.f32.mrb[0].mxu0
        %321 = vdwg.mxu0
        %322 = vst [vmem:[%s183] sm:$0xff] %v304
        %323 = vst [vmem:[%s183 + $0x8] sm:$0xff] %v309
        %324 = vst [vmem:[%s183 + $0x10] sm:$0xff] %v314
        %325 = vst [vmem:[%s183 + $0x18] sm:$0xff] %v319
        %s326 = sand.u32 %s109, 1
        %s327 = scalar_lea.sflag [#allocation3], %s326
        %s328 = sand.u32 %s109, 1
        %s329 = smul.addr %s328, 32
        %s330 = scalar_lea.vmem [#allocation2], %s329
        // Predicated region
        $region33: #{tpu_custom_call.1} parent=31 // pred_check
          %p331 = pneg %p119
        $region34: #{tpu_custom_call.1} parent=31 // pred_check_branch
          %333 = sbr.rel (%p331) target = $region36
        $region35: #{tpu_custom_call.1} parent=31 // pred_region
          %s335 = ssub.s32 512, 512
          %336 = vsyncadd %s327, %s335
          %s337 = smul.addr %s21, 4
          %s338 = sadd.s32 %s22, %s337
          %s339 = smul.addr %s338, 128
          %s340 = scalar_lea.hbm %s3, %s339
          %s341 = sshll.u32 %s330, 4
          %s342 = int_to_ptr.vmem [resolvable:$true] %s341
          %347 = dma.vmem_to_hbm [thread:$0]  %s342, 512, %s340, %s327, 128, 128, 8
        $region36: #{tpu_custom_call.1} parent=31 // pred_fallthru
          _
      $region32: #{tpu_custom_call.1} parent=5 // pred_fallthru
        _
      %p348 = scmp.le.s32.totalorder 2, %s12
      // Predicated region
      $region37: #{tpu_custom_call.1} parent=5 // pred_check
        %p349 = pneg %p348
      $region38: #{tpu_custom_call.1} parent=5 // pred_check_branch
        %351 = sbr.rel (%p349) target = $region40
      $region39: #{tpu_custom_call.1} parent=5 // pred_region
        %s352 = ssub.s32 %s12, 2
        // Predicated region
        $region41: #{tpu_custom_call.1} parent=39 // pred_check
          %p353 = pneg %p125
        $region42: #{tpu_custom_call.1} parent=39 // pred_check_branch
          %355 = sbr.rel (%p353) target = $region44
        $region43: #{tpu_custom_call.1} parent=39 // pred_region
          %s356 = sand.u32 %s110, 1
          %s357 = scalar_lea.sflag [#allocation3], %s356
          %s358 = sand.u32 %s110, 1
          %s359 = smul.addr %s358, 32
          %s360 = scalar_lea.vmem [#allocation2], %s359
          %361 = dma.done %s357, 512
        $region44: #{tpu_custom_call.1} parent=39 // pred_fallthru
          _
      $region40: #{tpu_custom_call.1} parent=5 // pred_fallthru
        _
    $region6: #{tpu_custom_call.1} parent=1 // loop_footer
      %s16 = sadd.s32 1, %s12
    $region7: #{tpu_custom_call.1} parent=1 // loop_footer_branch
      %11 = sbr.rel target = $region3
    $region8: #{tpu_custom_call.1} parent=1 // loop_exit
      _
    %362 = vsyncpa [#allocation3], 1
    %s363 = scalar_lea.sflag [#allocation3], 1
    %364 = vsyncpa %s363, 1

</llo_original>
